<compile_context>
chip_gen: v5e
topology: v5e:2x2
jax: 0.10.0
libtpu: 0.0.40
codegen_flags: <defaults>
</compile_context>

<pallas_src>
import numpy as np
import jax
import jax.numpy as jnp
from jax.experimental import pallas as pl
from jax.experimental.pallas import tpu as pltpu

INPUT_FEATS = 256                 # module default is 2238; kept small for test
HIDDEN1 = INPUT_FEATS // 2        # fc1 output
HIDDEN2 = 50                      # fc2 output (logical)
HIDDEN2_PAD = 64                  # fc2 output zero-padded for lane/sublane alignment
NUM_CLASSES = 2                   # fc3 output


def fcnn_kernel(x_ref, w1_ref, b1_ref, w2_ref, b2_ref, w3_ref, b3_ref, out_ref):
    x = x_ref[...]                                            # (tb, F) f32

    # fc1 + ReLU  (bf16 operands -> MXU native rate, f32 accumulate)
    h1 = jnp.dot(x.astype(jnp.bfloat16), w1_ref[...],
                 preferred_element_type=jnp.float32) + b1_ref[...]
    h1 = jnp.maximum(h1, 0.0)
    # dropout(p=0.5): identity at inference time

    # fc2 + ReLU
    h2 = jnp.dot(h1.astype(jnp.bfloat16), w2_ref[...],
                 preferred_element_type=jnp.float32) + b2_ref[...]
    h2 = jnp.maximum(h2, 0.0)
    # dropout(p=0.5): identity at inference time

    # fc3 logits
    logits = jnp.dot(h2.astype(jnp.bfloat16), w3_ref[...],
                     preferred_element_type=jnp.float32) + b3_ref[...]

    # softmax over the class axis (dim=1 in the PyTorch module), max-stabilized.
    m = jnp.max(logits, axis=-1, keepdims=True)
    e = jnp.exp(logits - m)
    s = jnp.sum(e, axis=-1, keepdims=True)
    out_ref[...] = e * pl.reciprocal(s, approx=True)   # EUP slot, VPU stays free


def fcnn_forward(x, w1, b1, w2, b2, w3, b3, *, block_b=128):
    B, F = x.shape
    block_b = min(block_b, B)
    assert B % block_b == 0, "pad the batch to a multiple of block_b"
    n_steps = B // block_b   # >=2 steps lets both v7x TCs take grid work

    # Weights/biases have a constant index_map (same block every grid step), so
    # single-buffer them -> no duplicated weight VMEM at production sizes.
    def const_spec(shape):
        return pl.BlockSpec(shape, lambda i: (0, 0),
                            pipeline_mode=pl.Buffered(1))

    itemsize = lambda a: a.size * a.dtype.itemsize
    flops = 2 * B * (F * w1.shape[1] + w2.shape[0] * w2.shape[1]
                     + w3.shape[0] * w3.shape[1])
    bytes_accessed = (itemsize(x) + itemsize(w1) + itemsize(b1) + itemsize(w2)
                      + itemsize(b2) + itemsize(w3) + itemsize(b3)
                      + B * NUM_CLASSES * 4)
    transcendentals = B * NUM_CLASSES + B   # exp per logit + reciprocal per row

    return pl.pallas_call(
        fcnn_kernel,
        out_shape=jax.ShapeDtypeStruct((B, NUM_CLASSES), jnp.float32),
        grid_spec=pltpu.PrefetchScalarGridSpec(
            num_scalar_prefetch=0,
            grid=(n_steps,),
            in_specs=[
                pl.BlockSpec((block_b, F), lambda i: (i, 0)),   # x tiled on batch
                const_spec(w1.shape), const_spec(b1.shape),
                const_spec(w2.shape), const_spec(b2.shape),
                const_spec(w3.shape), const_spec(b3.shape),
            ],
            out_specs=pl.BlockSpec((block_b, NUM_CLASSES), lambda i: (i, 0)),
        ),
        compiler_params=pltpu.CompilerParams(
            dimension_semantics=("parallel",)),
        cost_estimate=pl.CostEstimate(
            flops=int(flops),
            transcendentals=int(transcendentals),
            bytes_accessed=int(bytes_accessed)),
    )(x, w1, b1, w2, b2, w3, b3)


def init_linear(key, fan_in, fan_out):
    """PyTorch-style Linear init: U(-1/sqrt(fan_in), 1/sqrt(fan_in))."""
    kw, kb = jax.random.split(key)
    bound = 1.0 / np.sqrt(fan_in)
    w = jax.random.uniform(kw, (fan_in, fan_out), jnp.float32, -bound, bound)
    b = jax.random.uniform(kb, (1, fan_out), jnp.float32, -bound, bound)
    return w, b


def pad_hidden2(w2, b2, w3, pad_to=HIDDEN2_PAD):
    """Zero-pad fc2 outputs / fc3 inputs 50 -> 64.  Numerically exact: padded
    columns give ReLU(0+0)=0 and the matching zero rows of W3 contribute 0."""
    h2 = w2.shape[1]
    w2p = jnp.pad(w2, ((0, 0), (0, pad_to - h2)))
    b2p = jnp.pad(b2, ((0, 0), (0, pad_to - h2)))
    w3p = jnp.pad(w3, ((0, pad_to - h2), (0, 0)))
    return w2p, b2p, w3p


def reference_forward_f32(x, w1, b1, w2, b2, w3, b3):
    h1 = jnp.maximum(x @ w1 + b1, 0.0)
    h2 = jnp.maximum(h1 @ w2 + b2, 0.0)
    return jax.nn.softmax(h2 @ w3 + b3, axis=1)


def reference_forward_bf16(x, w1, b1, w2, b2, w3, b3):
    """Mirrors the kernel's bf16-at-MXU-boundary math (weights already bf16)."""
    h1 = jnp.maximum(jnp.dot(x.astype(jnp.bfloat16), w1,
                             preferred_element_type=jnp.float32) + b1, 0.0)
    h2 = jnp.maximum(jnp.dot(h1.astype(jnp.bfloat16), w2,
                             preferred_element_type=jnp.float32) + b2, 0.0)
    logits = jnp.dot(h2.astype(jnp.bfloat16), w3,
                     preferred_element_type=jnp.float32) + b3
    return jax.nn.softmax(logits, axis=1)


if __name__ == "__main__":
    key = jax.random.PRNGKey(0)
    kx, k1, k2, k3 = jax.random.split(key, 4)

    B = 256
    x = jax.random.normal(kx, (B, INPUT_FEATS), jnp.float32)

    w1, b1 = init_linear(k1, INPUT_FEATS, HIDDEN1)
    w2, b2 = init_linear(k2, HIDDEN1, HIDDEN2)
    w3, b3 = init_linear(k3, HIDDEN2, NUM_CLASSES)

    # host-side prep: pad HIDDEN2 50->64 (exact) and store weights in bf16
    w2p, b2p, w3p = pad_hidden2(w2, b2, w3)
    w1_bf = w1.astype(jnp.bfloat16)
    w2_bf = w2p.astype(jnp.bfloat16)
    w3_bf = w3p.astype(jnp.bfloat16)

    out = fcnn_forward(x, w1_bf, b1, w2_bf, b2p, w3_bf, b3, block_b=128)
    out = jax.block_until_ready(out)

    ref_bf16 = reference_forward_bf16(x, w1_bf, b1, w2_bf, b2p, w3_bf, b3)
    ref_f32 = reference_forward_f32(x, w1, b1, w2, b2, w3, b3)

    out_np = np.asarray(out)
    assert out.shape == (B, NUM_CLASSES)
    # tight check vs a reference using the same bf16-at-the-MXU math
    assert np.allclose(out_np, np.asarray(ref_bf16), rtol=1e-2, atol=1e-2)
    # looser check vs the exact f32 PyTorch-equivalent forward
    assert np.allclose(out_np, np.asarray(ref_f32), rtol=3e-2, atol=3e-2)
    # rows are (approximately) valid probability distributions
    assert np.allclose(out_np.sum(axis=1), 1.0, atol=1e-2)

    print("KERNEL_OK")
</pallas_src>

<mosaic_0001>
module attributes {stable_mosaic.version = 11 : i64} {
  func.func @fcnn_kernel(%arg0: i32, %arg1: memref<128x256xf32, #tpu.memory_space<vmem>>, %arg2: memref<256x128xbf16, #tpu.memory_space<vmem>>, %arg3: memref<1x128xf32, #tpu.memory_space<vmem>>, %arg4: memref<128x64xbf16, #tpu.memory_space<vmem>>, %arg5: memref<1x64xf32, #tpu.memory_space<vmem>>, %arg6: memref<64x2xbf16, #tpu.memory_space<vmem>>, %arg7: memref<1x2xf32, #tpu.memory_space<vmem>>, %arg8: memref<128x2xf32, #tpu.memory_space<vmem>>) attributes {dimension_semantics = [#tpu.dimension_semantics<parallel>], iteration_bounds = array<i64: 2>, scalar_prefetch = 0 : i64, scratch_operands = 0 : i64, tpu.core_type = #tpu.core_type<tc>, window_params = [{transform_indices = @transform_0, window_bounds = array<i64: 128, 256>}, {pipeline_mode = #tpu.pipeline_mode<synchronous>, transform_indices = @transform_1, window_bounds = array<i64: 256, 128>}, {pipeline_mode = #tpu.pipeline_mode<synchronous>, transform_indices = @transform_2, window_bounds = array<i64: 1, 128>}, {pipeline_mode = #tpu.pipeline_mode<synchronous>, transform_indices = @transform_3, window_bounds = array<i64: 128, 64>}, {pipeline_mode = #tpu.pipeline_mode<synchronous>, transform_indices = @transform_4, window_bounds = array<i64: 1, 64>}, {pipeline_mode = #tpu.pipeline_mode<synchronous>, transform_indices = @transform_5, window_bounds = array<i64: 64, 2>}, {pipeline_mode = #tpu.pipeline_mode<synchronous>, transform_indices = @transform_6, window_bounds = array<i64: 1, 2>}, {transform_indices = @transform_7, window_bounds = array<i64: 128, 2>}]} {
    %c0 = arith.constant 0 : index
    %c0_0 = arith.constant 0 : index
    %0 = vector.load %arg1[%c0, %c0_0] : memref<128x256xf32, #tpu.memory_space<vmem>>, vector<128x256xf32>
    %1 = arith.truncf %0 : vector<128x256xf32> to vector<128x256xbf16>
    %c0_1 = arith.constant 0 : index
    %c0_2 = arith.constant 0 : index
    %2 = vector.load %arg2[%c0_1, %c0_2] : memref<256x128xbf16, #tpu.memory_space<vmem>>, vector<256x128xbf16>
    %cst = arith.constant dense<0.000000e+00> : vector<128x128xf32>
    %3 = tpu.matmul %1, %2, %cst {dimension_numbers = #tpu.dot_dimension_numbers<[1], [0], [0], [1], [0, 0, 1, 1], [], []>} : vector<128x256xbf16>, vector<256x128xbf16>, vector<128x128xf32> -> vector<128x128xf32>
    %c0_3 = arith.constant 0 : index
    %c0_4 = arith.constant 0 : index
    %4 = vector.load %arg3[%c0_3, %c0_4] : memref<1x128xf32, #tpu.memory_space<vmem>>, vector<1x128xf32>
    %5 = vector.broadcast %4 : vector<1x128xf32> to vector<128x128xf32>
    %6 = arith.addf %3, %5 : vector<128x128xf32>
    %cst_5 = arith.constant 0.000000e+00 : f32
    %7 = vector.broadcast %cst_5 : f32 to vector<128x128xf32>
    %8 = arith.maximumf %6, %7 : vector<128x128xf32>
    %9 = arith.truncf %8 : vector<128x128xf32> to vector<128x128xbf16>
    %c0_6 = arith.constant 0 : index
    %c0_7 = arith.constant 0 : index
    %10 = vector.load %arg4[%c0_6, %c0_7] : memref<128x64xbf16, #tpu.memory_space<vmem>>, vector<128x64xbf16>
    %cst_8 = arith.constant dense<0.000000e+00> : vector<128x64xf32>
    %11 = tpu.matmul %9, %10, %cst_8 {dimension_numbers = #tpu.dot_dimension_numbers<[1], [0], [0], [1], [0, 0, 1, 1], [], []>} : vector<128x128xbf16>, vector<128x64xbf16>, vector<128x64xf32> -> vector<128x64xf32>
    %c0_9 = arith.constant 0 : index
    %c0_10 = arith.constant 0 : index
    %12 = vector.load %arg5[%c0_9, %c0_10] : memref<1x64xf32, #tpu.memory_space<vmem>>, vector<1x64xf32>
    %13 = vector.broadcast %12 : vector<1x64xf32> to vector<128x64xf32>
    %14 = arith.addf %11, %13 : vector<128x64xf32>
    %cst_11 = arith.constant 0.000000e+00 : f32
    %15 = vector.broadcast %cst_11 : f32 to vector<128x64xf32>
    %16 = arith.maximumf %14, %15 : vector<128x64xf32>
    %17 = arith.truncf %16 : vector<128x64xf32> to vector<128x64xbf16>
    %c0_12 = arith.constant 0 : index
    %c0_13 = arith.constant 0 : index
    %18 = vector.load %arg6[%c0_12, %c0_13] : memref<64x2xbf16, #tpu.memory_space<vmem>>, vector<64x2xbf16>
    %cst_14 = arith.constant dense<0.000000e+00> : vector<128x2xf32>
    %19 = tpu.matmul %17, %18, %cst_14 {dimension_numbers = #tpu.dot_dimension_numbers<[1], [0], [0], [1], [0, 0, 1, 1], [], []>} : vector<128x64xbf16>, vector<64x2xbf16>, vector<128x2xf32> -> vector<128x2xf32>
    %c0_15 = arith.constant 0 : index
    %c0_16 = arith.constant 0 : index
    %20 = vector.load %arg7[%c0_15, %c0_16] : memref<1x2xf32, #tpu.memory_space<vmem>>, vector<1x2xf32>
    %21 = vector.broadcast %20 : vector<1x2xf32> to vector<128x2xf32>
    %22 = arith.addf %19, %21 : vector<128x2xf32>
    %cst_17 = arith.constant dense<0xFF800000> : vector<128xf32>
    %23 = vector.multi_reduction <maximumf>, %22, %cst_17 [1] : vector<128x2xf32> to vector<128xf32>
    %24 = vector.shape_cast %23 : vector<128xf32> to vector<128x1xf32>
    %25 = vector.broadcast %24 : vector<128x1xf32> to vector<128x2xf32>
    %26 = arith.subf %22, %25 : vector<128x2xf32>
    %27 = math.exp %26 : vector<128x2xf32>
    %cst_18 = arith.constant dense<0.000000e+00> : vector<128xf32>
    %28 = vector.multi_reduction <add>, %27, %cst_18 [1] : vector<128x2xf32> to vector<128xf32>
    %29 = vector.shape_cast %28 : vector<128xf32> to vector<128x1xf32>
    %30 = tpu.reciprocal %29 {approx = true} : vector<128x1xf32> -> vector<128x1xf32>
    %31 = vector.broadcast %30 : vector<128x1xf32> to vector<128x2xf32>
    %32 = arith.mulf %27, %31 : vector<128x2xf32>
    %c0_19 = arith.constant 0 : index
    %c0_20 = arith.constant 0 : index
    %33 = vector.load %arg8[%c0_19, %c0_20] : memref<128x2xf32, #tpu.memory_space<vmem>>, vector<128x2xf32>
    tpu.vector_store %arg8[%c0_19, %c0_20], %32 {strides = array<i32>} : memref<128x2xf32, #tpu.memory_space<vmem>>, vector<128x2xf32>,
    return
  }
  func.func @transform_0(%arg0: i32) -> (i32, i32) {
    %c0_i32 = arith.constant 0 : i32
    %c0_i32_0 = arith.constant 0 : i32
    return %arg0, %c0_i32 : i32, i32
  }
  func.func @transform_1(%arg0: i32) -> (i32, i32) {
    %c0_i32 = arith.constant 0 : i32
    %c0_i32_0 = arith.constant 0 : i32
    %c0_i32_1 = arith.constant 0 : i32
    return %c0_i32, %c0_i32_0 : i32, i32
  }
  func.func @transform_2(%arg0: i32) -> (i32, i32) {
    %c0_i32 = arith.constant 0 : i32
    %c0_i32_0 = arith.constant 0 : i32
    %c0_i32_1 = arith.constant 0 : i32
    return %c0_i32, %c0_i32_0 : i32, i32
  }
  func.func @transform_3(%arg0: i32) -> (i32, i32) {
    %c0_i32 = arith.constant 0 : i32
    %c0_i32_0 = arith.constant 0 : i32
    %c0_i32_1 = arith.constant 0 : i32
    return %c0_i32, %c0_i32_0 : i32, i32
  }
  func.func @transform_4(%arg0: i32) -> (i32, i32) {
    %c0_i32 = arith.constant 0 : i32
    %c0_i32_0 = arith.constant 0 : i32
    %c0_i32_1 = arith.constant 0 : i32
    return %c0_i32, %c0_i32_0 : i32, i32
  }
  func.func @transform_5(%arg0: i32) -> (i32, i32) {
    %c0_i32 = arith.constant 0 : i32
    %c0_i32_0 = arith.constant 0 : i32
    %c0_i32_1 = arith.constant 0 : i32
    return %c0_i32, %c0_i32_0 : i32, i32
  }
  func.func @transform_6(%arg0: i32) -> (i32, i32) {
    %c0_i32 = arith.constant 0 : i32
    %c0_i32_0 = arith.constant 0 : i32
    %c0_i32_1 = arith.constant 0 : i32
    return %c0_i32, %c0_i32_0 : i32, i32
  }
  func.func @transform_7(%arg0: i32) -> (i32, i32) {
    %c0_i32 = arith.constant 0 : i32
    %c0_i32_0 = arith.constant 0 : i32
    return %arg0, %c0_i32 : i32, i32
  }
}

</mosaic_0001>

<llo_original>
// kernel: tpu_custom_call.1
$region0: #{tpu_custom_call.1}
  #allocation0 [shape = 'u32[]', space=smem, size = 0x4, offset = 0x4, fixed_abs, tag = 'smem constant byte address 0x4 - core index']
  #allocation1 [shape = 'u32[72,128]{1,0:T(1,128)}', space=vmem, size = 0x9000, scoped, tag = 'internal scratch']
  %s0 = inlined_call_operand.hbm [shape: f32[256,256], index: 0, kind: input, shape index: {}]
  %s1 = inlined_call_operand.vmem [shape: bf16[256,128], index: 1, kind: input, shape index: {}]
  %s2 = inlined_call_operand.vmem [shape: f32[1,128], index: 2, kind: input, shape index: {}]
  %s3 = inlined_call_operand.vmem [shape: bf16[128,64], index: 3, kind: input, shape index: {}]
  %s4 = inlined_call_operand.vmem [shape: f32[1,64], index: 4, kind: input, shape index: {}]
  %s5 = inlined_call_operand.vmem [shape: bf16[64,2], index: 5, kind: input, shape index: {}]
  %s6 = inlined_call_operand.vmem [shape: f32[1,2], index: 6, kind: input, shape index: {}]
  %s7 = inlined_call_operand.vmem [shape: f32[256,2], index: 7, kind: output, shape index: {}]
  %s8 = sld [smem:[#allocation0]]
  $region65: #{tpu_custom_call.1} parent=0
    _
  %s10 = ssub.s32 1, %s8
  %s11 = scalar_select 0, %s10, %s8
  $region1: #{tpu_custom_call.1} parent=0
    #allocation2 [shape = 'u8[262144]{0}', space=vmem, size = 0x40000, scoped, tag = 'input window, operand 0']
    #allocation3 [shape = 's32[2]{0}', space=sflag, size = 0x8, scoped, tag = 'scoped memory for tpu_custom_call.1']
    %12 = vsyncpa [#allocation3], 0
    %s13 = scalar_lea.sflag [#allocation3], 1
    %14 = vsyncpa %s13, 0
    loop: start=0, step=1, limit=4
    $region2: #{tpu_custom_call.1} parent=1 // loop_pre_header
      _
    $region3: #{tpu_custom_call.1} parent=1 // loop_header
      %s16 = sphi 0, %s20
      %p17 = scmp.ge.s32.totalorder %s16, 4
      %s26 = sphi 0, %s28
      %s29 = sphi 0, %s26
      %s30 = sphi 0, %s29
      %s46 = sphi 0, %s30
      %s50 = sphi 0, %s50
      %s52 = sphi 0, %s50
      %s53 = sphi 0, %s52
      %s67 = sphi 0, %s53
      %s71 = sphi 0, %s71
      %s73 = sphi 0, %s71
      %s74 = sphi 0, %s73
      %s88 = sphi 0, %s74
      %s92 = sphi 0, %s92
      %s94 = sphi 0, %s92
      %s95 = sphi 0, %s94
      %s109 = sphi 0, %s95
      %s113 = sphi 0, %s113
      %s115 = sphi 0, %s113
      %s116 = sphi 0, %s115
      %s130 = sphi 0, %s116
      %s134 = sphi 0, %s134
      %s136 = sphi 0, %s134
      %s137 = sphi 0, %s136
      %s151 = sphi 0, %s137
      %s155 = sphi 0, %s155
      %s157 = sphi 0, %s155
      %s158 = sphi 0, %s157
      %s172 = sphi 0, %s158
      %s178 = sphi 0, %s180
      %s181 = sphi 0, %s178
      %s182 = sphi 0, %s181
      %s198 = sphi 0, %s182
    $region4: #{tpu_custom_call.1} parent=1 // loop_header_branch
      %19 = sbr.rel (%p17) target = $region8
    $region5: #{tpu_custom_call.1} parent=1 // loop_body
      %s21 = ssub.s32 %s16, 1
      %s22 = ssub.s32 %s16, 2
      %s23 = sadd.s32 %s16, 1
      %s24 = ssub.s32 %s16, %s23
      %p25 = scmp.eq.s32.totalorder %s24, 0
      %s27 = sadd.s32 %s26, 1
      %s28 = scalar_select %p25, %s26, %s27
      %p31 = pneg %p25
      %p32 = scmp.eq.s32.totalorder %s16, 1
      %p33 = por %p31, %p32
      %p34 = scmp.ne.s32.totalorder %s26, %s29
      %p35 = scmp.eq.s32.totalorder %s16, 0
      %p36 = por %p34, %p35
      %p37 = scmp.ne.s32.totalorder %s26, %s29
      %p38 = scmp.eq.s32.totalorder %s21, 1
      %p39 = por %p37, %p38
      %p40 = scmp.ne.s32.totalorder %s29, %s30
      %p41 = scmp.eq.s32.totalorder %s21, 0
      %p42 = por %p40, %p41
      %p43 = scmp.ne.s32.totalorder %s29, %s30
      %p44 = scmp.eq.s32.totalorder %s22, 1
      %p45 = por %p43, %p44
      %p47 = scmp.ne.s32.totalorder %s30, %s46
      %p48 = scmp.eq.s32.totalorder %s22, 0
      %p49 = por %p47, %p48
      %s51 = sadd.s32 %s50, 1
      %p54 = scmp.eq.s32.totalorder %s16, 1
      %p55 = scmp.ne.s32.totalorder %s50, %s52
      %p56 = scmp.eq.s32.totalorder %s16, 0
      %p57 = por %p55, %p56
      %p58 = scmp.ne.s32.totalorder %s50, %s52
      %p59 = scmp.eq.s32.totalorder %s21, 1
      %p60 = por %p58, %p59
      %p61 = scmp.ne.s32.totalorder %s52, %s53
      %p62 = scmp.eq.s32.totalorder %s21, 0
      %p63 = por %p61, %p62
      %p64 = scmp.ne.s32.totalorder %s52, %s53
      %p65 = scmp.eq.s32.totalorder %s22, 1
      %p66 = por %p64, %p65
      %p68 = scmp.ne.s32.totalorder %s53, %s67
      %p69 = scmp.eq.s32.totalorder %s22, 0
      %p70 = por %p68, %p69
      %s72 = sadd.s32 %s71, 1
      %p75 = scmp.eq.s32.totalorder %s16, 1
      %p76 = scmp.ne.s32.totalorder %s71, %s73
      %p77 = scmp.eq.s32.totalorder %s16, 0
      %p78 = por %p76, %p77
      %p79 = scmp.ne.s32.totalorder %s71, %s73
      %p80 = scmp.eq.s32.totalorder %s21, 1
      %p81 = por %p79, %p80
      %p82 = scmp.ne.s32.totalorder %s73, %s74
      %p83 = scmp.eq.s32.totalorder %s21, 0
      %p84 = por %p82, %p83
      %p85 = scmp.ne.s32.totalorder %s73, %s74
      %p86 = scmp.eq.s32.totalorder %s22, 1
      %p87 = por %p85, %p86
      %p89 = scmp.ne.s32.totalorder %s74, %s88
      %p90 = scmp.eq.s32.totalorder %s22, 0
      %p91 = por %p89, %p90
      %s93 = sadd.s32 %s92, 1
      %p96 = scmp.eq.s32.totalorder %s16, 1
      %p97 = scmp.ne.s32.totalorder %s92, %s94
      %p98 = scmp.eq.s32.totalorder %s16, 0
      %p99 = por %p97, %p98
      %p100 = scmp.ne.s32.totalorder %s92, %s94
      %p101 = scmp.eq.s32.totalorder %s21, 1
      %p102 = por %p100, %p101
      %p103 = scmp.ne.s32.totalorder %s94, %s95
      %p104 = scmp.eq.s32.totalorder %s21, 0
      %p105 = por %p103, %p104
      %p106 = scmp.ne.s32.totalorder %s94, %s95
      %p107 = scmp.eq.s32.totalorder %s22, 1
      %p108 = por %p106, %p107
      %p110 = scmp.ne.s32.totalorder %s95, %s109
      %p111 = scmp.eq.s32.totalorder %s22, 0
      %p112 = por %p110, %p111
      %s114 = sadd.s32 %s113, 1
      %p117 = scmp.eq.s32.totalorder %s16, 1
      %p118 = scmp.ne.s32.totalorder %s113, %s115
      %p119 = scmp.eq.s32.totalorder %s16, 0
      %p120 = por %p118, %p119
      %p121 = scmp.ne.s32.totalorder %s113, %s115
      %p122 = scmp.eq.s32.totalorder %s21, 1
      %p123 = por %p121, %p122
      %p124 = scmp.ne.s32.totalorder %s115, %s116
      %p125 = scmp.eq.s32.totalorder %s21, 0
      %p126 = por %p124, %p125
      %p127 = scmp.ne.s32.totalorder %s115, %s116
      %p128 = scmp.eq.s32.totalorder %s22, 1
      %p129 = por %p127, %p128
      %p131 = scmp.ne.s32.totalorder %s116, %s130
      %p132 = scmp.eq.s32.totalorder %s22, 0
      %p133 = por %p131, %p132
      %s135 = sadd.s32 %s134, 1
      %p138 = scmp.eq.s32.totalorder %s16, 1
      %p139 = scmp.ne.s32.totalorder %s134, %s136
      %p140 = scmp.eq.s32.totalorder %s16, 0
      %p141 = por %p139, %p140
      %p142 = scmp.ne.s32.totalorder %s134, %s136
      %p143 = scmp.eq.s32.totalorder %s21, 1
      %p144 = por %p142, %p143
      %p145 = scmp.ne.s32.totalorder %s136, %s137
      %p146 = scmp.eq.s32.totalorder %s21, 0
      %p147 = por %p145, %p146
      %p148 = scmp.ne.s32.totalorder %s136, %s137
      %p149 = scmp.eq.s32.totalorder %s22, 1
      %p150 = por %p148, %p149
      %p152 = scmp.ne.s32.totalorder %s137, %s151
      %p153 = scmp.eq.s32.totalorder %s22, 0
      %p154 = por %p152, %p153
      %s156 = sadd.s32 %s155, 1
      %p159 = scmp.eq.s32.totalorder %s16, 1
      %p160 = scmp.ne.s32.totalorder %s155, %s157
      %p161 = scmp.eq.s32.totalorder %s16, 0
      %p162 = por %p160, %p161
      %p163 = scmp.ne.s32.totalorder %s155, %s157
      %p164 = scmp.eq.s32.totalorder %s21, 1
      %p165 = por %p163, %p164
      %p166 = scmp.ne.s32.totalorder %s157, %s158
      %p167 = scmp.eq.s32.totalorder %s21, 0
      %p168 = por %p166, %p167
      %p169 = scmp.ne.s32.totalorder %s157, %s158
      %p170 = scmp.eq.s32.totalorder %s22, 1
      %p171 = por %p169, %p170
      %p173 = scmp.ne.s32.totalorder %s158, %s172
      %p174 = scmp.eq.s32.totalorder %s22, 0
      %p175 = por %p173, %p174
      %s176 = ssub.s32 %s16, %s23
      %p177 = scmp.eq.s32.totalorder %s176, 0
      %s179 = sadd.s32 %s178, 1
      %s180 = scalar_select %p177, %s178, %s179
      %p183 = pneg %p177
      %p184 = scmp.eq.s32.totalorder %s16, 1
      %p185 = por %p183, %p184
      %p186 = scmp.ne.s32.totalorder %s178, %s181
      %p187 = scmp.eq.s32.totalorder %s16, 0
      %p188 = por %p186, %p187
      %p189 = scmp.ne.s32.totalorder %s178, %s181
      %p190 = scmp.eq.s32.totalorder %s21, 1
      %p191 = por %p189, %p190
      %p192 = scmp.ne.s32.totalorder %s181, %s182
      %p193 = scmp.eq.s32.totalorder %s21, 0
      %p194 = por %p192, %p193
      %p195 = scmp.ne.s32.totalorder %s181, %s182
      %p196 = scmp.eq.s32.totalorder %s22, 1
      %p197 = por %p195, %p196
      %p199 = scmp.ne.s32.totalorder %s182, %s198
      %p200 = scmp.eq.s32.totalorder %s22, 0
      %p201 = por %p199, %p200
      %p202 = scmp.le.s32.totalorder 1, %s16
      %p203 = scmp.lt.s32.totalorder %s16, 3
      %p204 = pnand %p202, %p203
      %p205 = pneg %p204
      // Predicated region
      $region9: #{tpu_custom_call.1} parent=5 // pred_check
        _
      $region10: #{tpu_custom_call.1} parent=5 // pred_check_branch
        %207 = sbr.rel (%p204) target = $region12
      $region11: #{tpu_custom_call.1} parent=5 // pred_region
        %s208 = ssub.s32 %s16, 1
        // Predicated region
        $region13: #{tpu_custom_call.1} parent=11 // pred_check
          %p209 = pneg %p63
        $region14: #{tpu_custom_call.1} parent=11 // pred_check_branch
          %211 = sbr.rel (%p209) target = $region16
        $region15: #{tpu_custom_call.1} parent=11 // pred_region
          _
        $region16: #{tpu_custom_call.1} parent=11 // pred_fallthru
          _
        // Predicated region
        $region17: #{tpu_custom_call.1} parent=11 // pred_check
          %p212 = pneg %p84
        $region18: #{tpu_custom_call.1} parent=11 // pred_check_branch
          %214 = sbr.rel (%p212) target = $region20
        $region19: #{tpu_custom_call.1} parent=11 // pred_region
          _
        $region20: #{tpu_custom_call.1} parent=11 // pred_fallthru
          _
        // Predicated region
        $region21: #{tpu_custom_call.1} parent=11 // pred_check
          %p215 = pneg %p105
        $region22: #{tpu_custom_call.1} parent=11 // pred_check_branch
          %217 = sbr.rel (%p215) target = $region24
        $region23: #{tpu_custom_call.1} parent=11 // pred_region
          _
        $region24: #{tpu_custom_call.1} parent=11 // pred_fallthru
          _
        // Predicated region
        $region25: #{tpu_custom_call.1} parent=11 // pred_check
          %p218 = pneg %p126
        $region26: #{tpu_custom_call.1} parent=11 // pred_check_branch
          %220 = sbr.rel (%p218) target = $region28
        $region27: #{tpu_custom_call.1} parent=11 // pred_region
          _
        $region28: #{tpu_custom_call.1} parent=11 // pred_fallthru
          _
        // Predicated region
        $region29: #{tpu_custom_call.1} parent=11 // pred_check
          %p221 = pneg %p147
        $region30: #{tpu_custom_call.1} parent=11 // pred_check_branch
          %223 = sbr.rel (%p221) target = $region32
        $region31: #{tpu_custom_call.1} parent=11 // pred_region
          _
        $region32: #{tpu_custom_call.1} parent=11 // pred_fallthru
          _
        // Predicated region
        $region33: #{tpu_custom_call.1} parent=11 // pred_check
          %p224 = pneg %p168
        $region34: #{tpu_custom_call.1} parent=11 // pred_check_branch
          %226 = sbr.rel (%p224) target = $region36
        $region35: #{tpu_custom_call.1} parent=11 // pred_region
          _
        $region36: #{tpu_custom_call.1} parent=11 // pred_fallthru
          _
      $region12: #{tpu_custom_call.1} parent=5 // pred_fallthru
        _
      %p227 = scmp.lt.s32.totalorder %s16, 2
      // Predicated region
      $region37: #{tpu_custom_call.1} parent=5 // pred_check
        %p228 = pneg %p227
      $region38: #{tpu_custom_call.1} parent=5 // pred_check_branch
        %230 = sbr.rel (%p228) target = $region40
      $region39: #{tpu_custom_call.1} parent=5 // pred_region
        // Predicated region
        $region41: #{tpu_custom_call.1} parent=39 // pred_check
          %p231 = pneg %p36
        $region42: #{tpu_custom_call.1} parent=39 // pred_check_branch
          %233 = sbr.rel (%p231) target = $region44
        $region43: #{tpu_custom_call.1} parent=39 // pred_region
          %s234 = sand.u32 %s26, 1
          %s235 = scalar_lea.sflag [#allocation3], %s234
          %s236 = sand.u32 %s26, 1
          %s237 = smul.addr %s236, 256
          %s238 = scalar_lea.vmem [#allocation2], %s237
          %s239 = smul.u32 16, %s16
          %241 = vsyncadd %s235, 0
          %s242 = smul.addr %s239, 2
          %s243 = smul.addr %s242, 8
          %s244 = scalar_lea.hbm %s0, %s243
          %s245 = sshll.u32 %s244, 4
          %s246 = int_to_ptr.hbm [resolvable:$true] %s245
          %s247 = sshll.u32 %s238, 4
          %s248 = int_to_ptr.vmem [resolvable:$true] %s247
          %253 = dma.hbm_to_vmem [thread:$0]  %s246, 4096, %s248, %s235, 256, 256, 16
        $region44: #{tpu_custom_call.1} parent=39 // pred_fallthru
          _
      $region40: #{tpu_custom_call.1} parent=5 // pred_fallthru
        _
      %p254 = scmp.le.s32.totalorder 1, %s16
      %p255 = scmp.lt.s32.totalorder %s16, 3
      %p256 = pnand %p254, %p255
      %p257 = pneg %p256
      // Predicated region
      $region45: #{tpu_custom_call.1} parent=5 // pred_check
        _
      $region46: #{tpu_custom_call.1} parent=5 // pred_check_branch
        %259 = sbr.rel (%p256) target = $region48
      $region47: #{tpu_custom_call.1} parent=5 // pred_region
        %s260 = ssub.s32 %s16, 1
        %s261 = sand.u32 %s29, 1
        %s262 = scalar_lea.sflag [#allocation3], %s261
        %s263 = sand.u32 %s29, 1
        %s264 = smul.addr %s263, 256
        %s265 = scalar_lea.vmem [#allocation2], %s264
        // Predicated region
        $region49: #{tpu_custom_call.1} parent=47 // pred_check
          %p266 = pneg %p42
        $region50: #{tpu_custom_call.1} parent=47 // pred_check_branch
          %268 = sbr.rel (%p266) target = $region52
        $region51: #{tpu_custom_call.1} parent=47 // pred_region
          %270 = dma.done %s262, 4096
        $region52: #{tpu_custom_call.1} parent=47 // pred_fallthru
          _
        %s271 = sand.u32 %s29, 1
        %s272 = scalar_lea.sflag [#allocation3], %s271
        %s273 = sand.u32 %s29, 1
        %s274 = smul.addr %s273, 256
        %s275 = scalar_lea.vmem [#allocation2], %s274
        %p276 = pneg %p42
        %p277 = pneg %p39
        %p278 = pneg %p63
        %p279 = pneg %p60
        %p280 = pneg %p84
        %p281 = pneg %p81
        %p282 = pneg %p105
        %p283 = pneg %p102
        %p284 = pneg %p126
        %p285 = pneg %p123
        %p286 = pneg %p147
        %p287 = pneg %p144
        %p288 = pneg %p168
        %p289 = pneg %p165
        %p290 = pneg %p194
        %p291 = pneg %p191
        %s292 = smul.u32 16, %s21
        %p293 = scmp.lt.s32.totalorder %s292, 31
        %s294 = scalar_select %p293, %s292, 31
        %s295 = smul.addr %s294, 8
        %s296 = scalar_lea.vmem %s7, %s295
        %s297 = smul.u32 16, %s21
        %s298 = smul.u32 16, %s21
        %p299 = scmp.lt.s32.totalorder %s298, 31
        %s300 = scalar_select %p299, %s298, 31
        %s301 = smul.addr %s300, 8
        %s302 = scalar_lea.vmem %s7, %s301
        %s303 = smul.u32 16, %s21
        %v305 = vld [vmem:[%s265] sm:$0xff]
        %v306 = vld [vmem:[%s265 + $0x8] sm:$0xff]
        %v307 = vld [vmem:[%s265 + $0x10] sm:$0xff]
        %v308 = vld [vmem:[%s265 + $0x18] sm:$0xff]
        %v309 = vld [vmem:[%s265 + $0x20] sm:$0xff]
        %v310 = vld [vmem:[%s265 + $0x28] sm:$0xff]
        %v311 = vld [vmem:[%s265 + $0x30] sm:$0xff]
        %v312 = vld [vmem:[%s265 + $0x38] sm:$0xff]
        %v313 = vld [vmem:[%s265 + $0x40] sm:$0xff]
        %v314 = vld [vmem:[%s265 + $0x48] sm:$0xff]
        %v315 = vld [vmem:[%s265 + $0x50] sm:$0xff]
        %v316 = vld [vmem:[%s265 + $0x58] sm:$0xff]
        %v317 = vld [vmem:[%s265 + $0x60] sm:$0xff]
        %v318 = vld [vmem:[%s265 + $0x68] sm:$0xff]
        %v319 = vld [vmem:[%s265 + $0x70] sm:$0xff]
        %v320 = vld [vmem:[%s265 + $0x78] sm:$0xff]
        %v321 = vld [vmem:[%s265 + $0x80] sm:$0xff]
        %v322 = vld [vmem:[%s265 + $0x88] sm:$0xff]
        %v323 = vld [vmem:[%s265 + $0x90] sm:$0xff]
        %v324 = vld [vmem:[%s265 + $0x98] sm:$0xff]
        %v325 = vld [vmem:[%s265 + $0xa0] sm:$0xff]
        %v326 = vld [vmem:[%s265 + $0xa8] sm:$0xff]
        %v327 = vld [vmem:[%s265 + $0xb0] sm:$0xff]
        %v328 = vld [vmem:[%s265 + $0xb8] sm:$0xff]
        %v329 = vld [vmem:[%s265 + $0xc0] sm:$0xff]
        %v330 = vld [vmem:[%s265 + $0xc8] sm:$0xff]
        %v331 = vld [vmem:[%s265 + $0xd0] sm:$0xff]
        %v332 = vld [vmem:[%s265 + $0xd8] sm:$0xff]
        %v333 = vld [vmem:[%s265 + $0xe0] sm:$0xff]
        %v334 = vld [vmem:[%s265 + $0xe8] sm:$0xff]
        %v335 = vld [vmem:[%s265 + $0xf0] sm:$0xff]
        %v336 = vld [vmem:[%s265 + $0xf8] sm:$0xff]
        %v337 = vpack.c.bf16 %v307, %v305
        %v338 = vpack.c.bf16 %v308, %v306
        %v339 = vpack.c.bf16 %v311, %v309
        %v340 = vpack.c.bf16 %v312, %v310
        %v341 = vpack.c.bf16 %v315, %v313
        %v342 = vpack.c.bf16 %v316, %v314
        %v343 = vpack.c.bf16 %v319, %v317
        %v344 = vpack.c.bf16 %v320, %v318
        %v345 = vpack.c.bf16 %v323, %v321
        %v346 = vpack.c.bf16 %v324, %v322
        %v347 = vpack.c.bf16 %v327, %v325
        %v348 = vpack.c.bf16 %v328, %v326
        %v349 = vpack.c.bf16 %v331, %v329
        %v350 = vpack.c.bf16 %v332, %v330
        %v351 = vpack.c.bf16 %v335, %v333
        %v352 = vpack.c.bf16 %v336, %v334
        %v353 = vld [vmem:[%s1] sm:$0xf]
        %v354 = vld [vmem:[%s1 + $0x4] sm:$0xf]
        %v355 = vld [vmem:[%s1 + $0x8] sm:$0xf]
        %v356 = vld [vmem:[%s1 + $0xc] sm:$0xf]
        %v357 = vld [vmem:[%s1 + $0x10] sm:$0xf]
        %v358 = vld [vmem:[%s1 + $0x14] sm:$0xf]
        %v359 = vld [vmem:[%s1 + $0x18] sm:$0xf]
        %v360 = vld [vmem:[%s1 + $0x1c] sm:$0xf]
        %v361 = vld [vmem:[%s1 + $0x20] sm:$0xf]
        %v362 = vld [vmem:[%s1 + $0x24] sm:$0xf]
        %v363 = vld [vmem:[%s1 + $0x28] sm:$0xf]
        %v364 = vld [vmem:[%s1 + $0x2c] sm:$0xf]
        %v365 = vld [vmem:[%s1 + $0x30] sm:$0xf]
        %v366 = vld [vmem:[%s1 + $0x34] sm:$0xf]
        %v367 = vld [vmem:[%s1 + $0x38] sm:$0xf]
        %v368 = vld [vmem:[%s1 + $0x3c] sm:$0xf]
        %v369 = vld [vmem:[%s1 + $0x40] sm:$0xf]
        %v370 = vld [vmem:[%s1 + $0x44] sm:$0xf]
        %v371 = vld [vmem:[%s1 + $0x48] sm:$0xf]
        %v372 = vld [vmem:[%s1 + $0x4c] sm:$0xf]
        %v373 = vld [vmem:[%s1 + $0x50] sm:$0xf]
        %v374 = vld [vmem:[%s1 + $0x54] sm:$0xf]
        %v375 = vld [vmem:[%s1 + $0x58] sm:$0xf]
        %v376 = vld [vmem:[%s1 + $0x5c] sm:$0xf]
        %v377 = vld [vmem:[%s1 + $0x60] sm:$0xf]
        %v378 = vld [vmem:[%s1 + $0x64] sm:$0xf]
        %v379 = vld [vmem:[%s1 + $0x68] sm:$0xf]
        %v380 = vld [vmem:[%s1 + $0x6c] sm:$0xf]
        %v381 = vld [vmem:[%s1 + $0x70] sm:$0xf]
        %v382 = vld [vmem:[%s1 + $0x74] sm:$0xf]
        %v383 = vld [vmem:[%s1 + $0x78] sm:$0xf]
        %v384 = vld [vmem:[%s1 + $0x7c] sm:$0xf]
        %v385 = vld [vmem:[%s2] sm:$0x1]
        %v387 = vperm.slane %v385, 0
        %v421 = vunpack.c.l.b16 %v353
        %v422 = vunpack.c.l.b16 %v354
        %v423 = vunpack.c.l.b16 %v355
        %v424 = vunpack.c.l.b16 %v356
        %v425 = vunpack.c.l.b16 %v357
        %v426 = vunpack.c.l.b16 %v358
        %v427 = vunpack.c.l.b16 %v359
        %v428 = vunpack.c.l.b16 %v360
        %v429 = vunpack.c.l.b16 %v361
        %v430 = vunpack.c.l.b16 %v362
        %v431 = vunpack.c.l.b16 %v363
        %v432 = vunpack.c.l.b16 %v364
        %v433 = vunpack.c.l.b16 %v365
        %v434 = vunpack.c.l.b16 %v366
        %v435 = vunpack.c.l.b16 %v367
        %v436 = vunpack.c.l.b16 %v368
        %v437 = vunpack.c.l.b16 %v369
        %v438 = vunpack.c.l.b16 %v370
        %v439 = vunpack.c.l.b16 %v371
        %v440 = vunpack.c.l.b16 %v372
        %v441 = vunpack.c.l.b16 %v373
        %v442 = vunpack.c.l.b16 %v374
        %v443 = vunpack.c.l.b16 %v375
        %v444 = vunpack.c.l.b16 %v376
        %v445 = vunpack.c.l.b16 %v377
        %v446 = vunpack.c.l.b16 %v378
        %v447 = vunpack.c.l.b16 %v379
        %v448 = vunpack.c.l.b16 %v380
        %v449 = vunpack.c.l.b16 %v381
        %v450 = vunpack.c.l.b16 %v382
        %v451 = vunpack.c.l.b16 %v383
        %v452 = vunpack.c.l.b16 %v384
        %v453 = vpack.c.b16 %v422, %v421
        %v454 = vpack.c.b16 %v424, %v423
        %v455 = vpack.c.b16 %v426, %v425
        %v456 = vpack.c.b16 %v428, %v427
        %v457 = vpack.c.b16 %v430, %v429
        %v458 = vpack.c.b16 %v432, %v431
        %v459 = vpack.c.b16 %v434, %v433
        %v460 = vpack.c.b16 %v436, %v435
        %v461 = vpack.c.b16 %v438, %v437
        %v462 = vpack.c.b16 %v440, %v439
        %v463 = vpack.c.b16 %v442, %v441
        %v464 = vpack.c.b16 %v444, %v443
        %v465 = vpack.c.b16 %v446, %v445
        %v466 = vpack.c.b16 %v448, %v447
        %v467 = vpack.c.b16 %v450, %v449
        %v468 = vpack.c.b16 %v452, %v451
        %485 = vmatpush.bf16.msra.mxu0 %v460
        %486 = vmatpush.bf16.msra.mxu0 %v459
        %487 = vmatpush.bf16.msra.mxu0 %v458
        %488 = vmatpush.bf16.msra.mxu0 %v457
        %489 = vmatpush.bf16.msra.mxu0 %v456
        %490 = vmatpush.bf16.msra.mxu0 %v455
        %491 = vmatpush.bf16.msra.mxu0 %v454
        %492 = vmatpush.bf16.msra.mxu0 %v453
        %493 = vmatmul.bf16.gmra.mxu0 %v337
        %v494 = vpop.f32.mrf.mxu0
        %v495 = vadd.f32 %v387, %v494
        %v496 = vpop.f32.mrf.mxu0
        %v497 = vadd.f32 %v387, %v496
        %498 = vmatmul.bf16.gmra.mxu0 %v339
        %v499 = vpop.f32.mrf.mxu0
        %v500 = vadd.f32 %v387, %v499
        %v501 = vpop.f32.mrf.mxu0
        %v502 = vadd.f32 %v387, %v501
        %503 = vmatmul.bf16.gmra.mxu0 %v341
        %v504 = vpop.f32.mrf.mxu0
        %v505 = vadd.f32 %v387, %v504
        %v506 = vpop.f32.mrf.mxu0
        %v507 = vadd.f32 %v387, %v506
        %508 = vmatmul.bf16.gmra.mxu0 %v343
        %v509 = vpop.f32.mrf.mxu0
        %v510 = vadd.f32 %v387, %v509
        %v511 = vpop.f32.mrf.mxu0
        %v512 = vadd.f32 %v387, %v511
        %513 = vmatmul.bf16.gmra.mxu0 %v345
        %v514 = vpop.f32.mrf.mxu0
        %v515 = vadd.f32 %v387, %v514
        %v516 = vpop.f32.mrf.mxu0
        %v517 = vadd.f32 %v387, %v516
        %518 = vmatmul.bf16.gmra.mxu0 %v347
        %v519 = vpop.f32.mrf.mxu0
        %v520 = vadd.f32 %v387, %v519
        %v521 = vpop.f32.mrf.mxu0
        %v522 = vadd.f32 %v387, %v521
        %523 = vmatmul.bf16.gmra.mxu0 %v349
        %v524 = vpop.f32.mrf.mxu0
        %v525 = vadd.f32 %v387, %v524
        %v526 = vpop.f32.mrf.mxu0
        %v527 = vadd.f32 %v387, %v526
        %528 = vmatmul.bf16.gmra.mxu0 %v351
        %v529 = vpop.f32.mrf.mxu0
        %v530 = vadd.f32 %v387, %v529
        %v531 = vpop.f32.mrf.mxu0
        %v532 = vadd.f32 %v387, %v531
        %533 = vdwg.mxu0
        %534 = vmatpush.bf16.msra.mxu0 %v468
        %535 = vmatpush.bf16.msra.mxu0 %v467
        %536 = vmatpush.bf16.msra.mxu0 %v466
        %537 = vmatpush.bf16.msra.mxu0 %v465
        %538 = vmatpush.bf16.msra.mxu0 %v464
        %539 = vmatpush.bf16.msra.mxu0 %v463
        %540 = vmatpush.bf16.msra.mxu0 %v462
        %541 = vmatpush.bf16.msra.mxu0 %v461
        %542 = vmatmul.bf16.gmra.mxu0 %v338
        %v543 = vpop.f32.mrf.mxu0
        %v544 = vadd.f32 %v495, %v543
        %v545 = vpop.f32.mrf.mxu0
        %v546 = vadd.f32 %v497, %v545
        %547 = vmatmul.bf16.gmra.mxu0 %v340
        %v548 = vpop.f32.mrf.mxu0
        %v549 = vadd.f32 %v500, %v548
        %v550 = vpop.f32.mrf.mxu0
        %v551 = vadd.f32 %v502, %v550
        %552 = vmatmul.bf16.gmra.mxu0 %v342
        %v553 = vpop.f32.mrf.mxu0
        %v554 = vadd.f32 %v505, %v553
        %v555 = vpop.f32.mrf.mxu0
        %v556 = vadd.f32 %v507, %v555
        %557 = vmatmul.bf16.gmra.mxu0 %v344
        %v558 = vpop.f32.mrf.mxu0
        %v559 = vadd.f32 %v510, %v558
        %v560 = vpop.f32.mrf.mxu0
        %v561 = vadd.f32 %v512, %v560
        %562 = vmatmul.bf16.gmra.mxu0 %v346
        %v563 = vpop.f32.mrf.mxu0
        %v564 = vadd.f32 %v515, %v563
        %v565 = vpop.f32.mrf.mxu0
        %v566 = vadd.f32 %v517, %v565
        %567 = vmatmul.bf16.gmra.mxu0 %v348
        %v568 = vpop.f32.mrf.mxu0
        %v569 = vadd.f32 %v520, %v568
        %v570 = vpop.f32.mrf.mxu0
        %v571 = vadd.f32 %v522, %v570
        %572 = vmatmul.bf16.gmra.mxu0 %v350
        %v573 = vpop.f32.mrf.mxu0
        %v574 = vadd.f32 %v525, %v573
        %v575 = vpop.f32.mrf.mxu0
        %v576 = vadd.f32 %v527, %v575
        %577 = vmatmul.bf16.gmra.mxu0 %v352
        %v578 = vpop.f32.mrf.mxu0
        %v579 = vadd.f32 %v530, %v578
        %v580 = vpop.f32.mrf.mxu0
        %v581 = vadd.f32 %v532, %v580
        %582 = vdwg.mxu0
        %v583 = vmax.f32 %v544, 0.0
        %v584 = vmax.f32 %v546, 0.0
        %v585 = vmax.f32 %v549, 0.0
        %v586 = vmax.f32 %v551, 0.0
        %v587 = vmax.f32 %v554, 0.0
        %v588 = vmax.f32 %v556, 0.0
        %v589 = vmax.f32 %v559, 0.0
        %v590 = vmax.f32 %v561, 0.0
        %v591 = vmax.f32 %v564, 0.0
        %v592 = vmax.f32 %v566, 0.0
        %v593 = vmax.f32 %v569, 0.0
        %v594 = vmax.f32 %v571, 0.0
        %v595 = vmax.f32 %v574, 0.0
        %v596 = vmax.f32 %v576, 0.0
        %v597 = vmax.f32 %v579, 0.0
        %v598 = vmax.f32 %v581, 0.0
        %v599 = vpack.c.bf16 %v584, %v583
        %v600 = vpack.c.bf16 %v586, %v585
        %v601 = vpack.c.bf16 %v588, %v587
        %v602 = vpack.c.bf16 %v590, %v589
        %v603 = vpack.c.bf16 %v592, %v591
        %v604 = vpack.c.bf16 %v594, %v593
        %v605 = vpack.c.bf16 %v596, %v595
        %v606 = vpack.c.bf16 %v598, %v597
        %v607 = vld [vmem:[%s3] sm:$0xf]
        %v608 = vld [vmem:[%s3 + $0x4] sm:$0xf]
        %v609 = vld [vmem:[%s3 + $0x8] sm:$0xf]
        %v610 = vld [vmem:[%s3 + $0xc] sm:$0xf]
        %v611 = vld [vmem:[%s3 + $0x10] sm:$0xf]
        %v612 = vld [vmem:[%s3 + $0x14] sm:$0xf]
        %v613 = vld [vmem:[%s3 + $0x18] sm:$0xf]
        %v614 = vld [vmem:[%s3 + $0x1c] sm:$0xf]
        %v615 = vld [vmem:[%s3 + $0x20] sm:$0xf]
        %v616 = vld [vmem:[%s3 + $0x24] sm:$0xf]
        %v617 = vld [vmem:[%s3 + $0x28] sm:$0xf]
        %v618 = vld [vmem:[%s3 + $0x2c] sm:$0xf]
        %v619 = vld [vmem:[%s3 + $0x30] sm:$0xf]
        %v620 = vld [vmem:[%s3 + $0x34] sm:$0xf]
        %v621 = vld [vmem:[%s3 + $0x38] sm:$0xf]
        %v622 = vld [vmem:[%s3 + $0x3c] sm:$0xf]
        %v623 = vld [vmem:[%s4] sm:$0x1]
        %v625 = vperm.slane %v623, 0
        %v643 = vunpack.c.l.b16 %v607
        %v644 = vunpack.c.l.b16 %v608
        %v645 = vunpack.c.l.b16 %v609
        %v646 = vunpack.c.l.b16 %v610
        %v647 = vunpack.c.l.b16 %v611
        %v648 = vunpack.c.l.b16 %v612
        %v649 = vunpack.c.l.b16 %v613
        %v650 = vunpack.c.l.b16 %v614
        %v651 = vunpack.c.l.b16 %v615
        %v652 = vunpack.c.l.b16 %v616
        %v653 = vunpack.c.l.b16 %v617
        %v654 = vunpack.c.l.b16 %v618
        %v655 = vunpack.c.l.b16 %v619
        %v656 = vunpack.c.l.b16 %v620
        %v657 = vunpack.c.l.b16 %v621
        %v658 = vunpack.c.l.b16 %v622
        %v659 = vpack.c.b16 %v644, %v643
        %v660 = vpack.c.b16 %v646, %v645
        %v661 = vpack.c.b16 %v648, %v647
        %v662 = vpack.c.b16 %v650, %v649
        %v663 = vpack.c.b16 %v652, %v651
        %v664 = vpack.c.b16 %v654, %v653
        %v665 = vpack.c.b16 %v656, %v655
        %v666 = vpack.c.b16 %v658, %v657
        %675 = vmatpush.bf16.msra.mxu0 %v666
        %676 = vmatpush.bf16.msra.mxu0 %v665
        %677 = vmatpush.bf16.msra.mxu0 %v664
        %678 = vmatpush.bf16.msra.mxu0 %v663
        %679 = vmatpush.bf16.msra.mxu0 %v662
        %680 = vmatpush.bf16.msra.mxu0 %v661
        %681 = vmatpush.bf16.msra.mxu0 %v660
        %682 = vmatpush.bf16.msra.mxu0 %v659
        %683 = vmatmul.bf16.gmra.mxu0 %v599
        %v684 = vpop.f32.mrf.mxu0
        %v685 = vadd.f32 %v625, %v684
        %v686 = vpop.f32.mrf.mxu0
        %v687 = vadd.f32 %v625, %v686
        %688 = vmatmul.bf16.gmra.mxu0 %v600
        %v689 = vpop.f32.mrf.mxu0
        %v690 = vadd.f32 %v625, %v689
        %v691 = vpop.f32.mrf.mxu0
        %v692 = vadd.f32 %v625, %v691
        %693 = vmatmul.bf16.gmra.mxu0 %v601
        %v694 = vpop.f32.mrf.mxu0
        %v695 = vadd.f32 %v625, %v694
        %v696 = vpop.f32.mrf.mxu0
        %v697 = vadd.f32 %v625, %v696
        %698 = vmatmul.bf16.gmra.mxu0 %v602
        %v699 = vpop.f32.mrf.mxu0
        %v700 = vadd.f32 %v625, %v699
        %v701 = vpop.f32.mrf.mxu0
        %v702 = vadd.f32 %v625, %v701
        %703 = vmatmul.bf16.gmra.mxu0 %v603
        %v704 = vpop.f32.mrf.mxu0
        %v705 = vadd.f32 %v625, %v704
        %v706 = vpop.f32.mrf.mxu0
        %v707 = vadd.f32 %v625, %v706
        %708 = vmatmul.bf16.gmra.mxu0 %v604
        %v709 = vpop.f32.mrf.mxu0
        %v710 = vadd.f32 %v625, %v709
        %v711 = vpop.f32.mrf.mxu0
        %v712 = vadd.f32 %v625, %v711
        %713 = vmatmul.bf16.gmra.mxu0 %v605
        %v714 = vpop.f32.mrf.mxu0
        %v715 = vadd.f32 %v625, %v714
        %v716 = vpop.f32.mrf.mxu0
        %v717 = vadd.f32 %v625, %v716
        %718 = vmatmul.bf16.gmra.mxu0 %v606
        %v719 = vpop.f32.mrf.mxu0
        %v720 = vadd.f32 %v625, %v719
        %v721 = vpop.f32.mrf.mxu0
        %v722 = vadd.f32 %v625, %v721
        %723 = vdwg.mxu0
        %v724 = vmax.f32 %v685, 0.0
        %v725 = vmax.f32 %v687, 0.0
        %v726 = vmax.f32 %v690, 0.0
        %v727 = vmax.f32 %v692, 0.0
        %v728 = vmax.f32 %v695, 0.0
        %v729 = vmax.f32 %v697, 0.0
        %v730 = vmax.f32 %v700, 0.0
        %v731 = vmax.f32 %v702, 0.0
        %v732 = vmax.f32 %v705, 0.0
        %v733 = vmax.f32 %v707, 0.0
        %v734 = vmax.f32 %v710, 0.0
        %v735 = vmax.f32 %v712, 0.0
        %v736 = vmax.f32 %v715, 0.0
        %v737 = vmax.f32 %v717, 0.0
        %v738 = vmax.f32 %v720, 0.0
        %v739 = vmax.f32 %v722, 0.0
        %v740 = vpack.c.bf16 %v725, %v724
        %v741 = vpack.c.bf16 %v727, %v726
        %v742 = vpack.c.bf16 %v729, %v728
        %v743 = vpack.c.bf16 %v731, %v730
        %v744 = vpack.c.bf16 %v733, %v732
        %v745 = vpack.c.bf16 %v735, %v734
        %v746 = vpack.c.bf16 %v737, %v736
        %v747 = vpack.c.bf16 %v739, %v738
        %v748 = vld [vmem:[%s5] sm:$0xf]
        %v749 = vld [vmem:[%s5 + $0x4] sm:$0xf]
        %v750 = vld [vmem:[%s5 + $0x8] sm:$0xf]
        %v751 = vld [vmem:[%s5 + $0xc] sm:$0xf]
        %v752 = vld [vmem:[%s5 + $0x10] sm:$0xf]
        %v753 = vld [vmem:[%s5 + $0x14] sm:$0xf]
        %v754 = vld [vmem:[%s5 + $0x18] sm:$0xf]
        %v755 = vld [vmem:[%s5 + $0x1c] sm:$0xf]
        %v756 = vld [vmem:[%s6] sm:$0x1]
        %v758 = vperm.slane %v756, 0
        %v768 = vunpack.c.l.b16 %v748
        %v769 = vunpack.c.l.b16 %v749
        %v770 = vunpack.c.l.b16 %v750
        %v771 = vunpack.c.l.b16 %v751
        %v772 = vunpack.c.l.b16 %v752
        %v773 = vunpack.c.l.b16 %v753
        %v774 = vunpack.c.l.b16 %v754
        %v775 = vunpack.c.l.b16 %v755
        %v776 = vpack.c.b16 %v769, %v768
        %v777 = vpack.c.b16 %v771, %v770
        %v778 = vpack.c.b16 %v773, %v772
        %v779 = vpack.c.b16 %v775, %v774
        %vm784 = vcmask 523264
        %v786 = vsel %vm784, %v740, 0
        %v789 = vsel %vm784, %v741, 0
        %v792 = vsel %vm784, %v742, 0
        %v795 = vsel %vm784, %v743, 0
        %v798 = vsel %vm784, %v744, 0
        %v801 = vsel %vm784, %v745, 0
        %v804 = vsel %vm784, %v746, 0
        %v807 = vsel %vm784, %v747, 0
        %809 = vmatpush.bf16.msra.mxu0 0
        %810 = vmatpush.bf16.msra.mxu0 0
        %811 = vmatpush.bf16.msra.mxu0 0
        %812 = vmatpush.bf16.msra.mxu0 0
        %813 = vmatpush.bf16.msra.mxu0 %v779
        %814 = vmatpush.bf16.msra.mxu0 %v778
        %815 = vmatpush.bf16.msra.mxu0 %v777
        %816 = vmatpush.bf16.msra.mxu0 %v776
        %817 = vmatmul.bf16.gmra.mxu0 %v786
        %v818 = vpop.f32.mrf.mxu0
        %v819 = vadd.f32 %v758, %v818
        %v820 = vpop.f32.mrf.mxu0
        %v821 = vadd.f32 %v758, %v820
        %822 = vmatmul.bf16.gmra.mxu0 %v789
        %v823 = vpop.f32.mrf.mxu0
        %v824 = vadd.f32 %v758, %v823
        %v825 = vpop.f32.mrf.mxu0
        %v826 = vadd.f32 %v758, %v825
        %827 = vmatmul.bf16.gmra.mxu0 %v792
        %v828 = vpop.f32.mrf.mxu0
        %v829 = vadd.f32 %v758, %v828
        %v830 = vpop.f32.mrf.mxu0
        %v831 = vadd.f32 %v758, %v830
        %832 = vmatmul.bf16.gmra.mxu0 %v795
        %v833 = vpop.f32.mrf.mxu0
        %v834 = vadd.f32 %v758, %v833
        %v835 = vpop.f32.mrf.mxu0
        %v836 = vadd.f32 %v758, %v835
        %837 = vmatmul.bf16.gmra.mxu0 %v798
        %v838 = vpop.f32.mrf.mxu0
        %v839 = vadd.f32 %v758, %v838
        %v840 = vpop.f32.mrf.mxu0
        %v841 = vadd.f32 %v758, %v840
        %842 = vmatmul.bf16.gmra.mxu0 %v801
        %v843 = vpop.f32.mrf.mxu0
        %v844 = vadd.f32 %v758, %v843
        %v845 = vpop.f32.mrf.mxu0
        %v846 = vadd.f32 %v758, %v845
        %847 = vmatmul.bf16.gmra.mxu0 %v804
        %v848 = vpop.f32.mrf.mxu0
        %v849 = vadd.f32 %v758, %v848
        %v850 = vpop.f32.mrf.mxu0
        %v851 = vadd.f32 %v758, %v850
        %852 = vmatmul.bf16.gmra.mxu0 %v807
        %v853 = vpop.f32.mrf.mxu0
        %v854 = vadd.f32 %v758, %v853
        %v855 = vpop.f32.mrf.mxu0
        %v856 = vadd.f32 %v758, %v855
        %857 = vdwg.mxu0
        %vm858 = vcmask 15360
        %v859 = vsel %vm858, %v819, -inf
        %860 = vmax.xlane.f32.xlu0 %v859
        %v861 = vpop.xlane.xlu0 %860
        %v862 = vsel %vm858, %v821, -inf
        %863 = vmax.xlane.f32.xlu0 %v862
        %v864 = vpop.xlane.xlu0 %863
        %v865 = vsel %vm858, %v824, -inf
        %866 = vmax.xlane.f32.xlu0 %v865
        %v867 = vpop.xlane.xlu0 %866
        %v868 = vsel %vm858, %v826, -inf
        %869 = vmax.xlane.f32.xlu0 %v868
        %v870 = vpop.xlane.xlu0 %869
        %v871 = vsel %vm858, %v829, -inf
        %872 = vmax.xlane.f32.xlu0 %v871
        %v873 = vpop.xlane.xlu0 %872
        %v874 = vsel %vm858, %v831, -inf
        %875 = vmax.xlane.f32.xlu0 %v874
        %v876 = vpop.xlane.xlu0 %875
        %v877 = vsel %vm858, %v834, -inf
        %878 = vmax.xlane.f32.xlu0 %v877
        %v879 = vpop.xlane.xlu0 %878
        %v880 = vsel %vm858, %v836, -inf
        %881 = vmax.xlane.f32.xlu0 %v880
        %v882 = vpop.xlane.xlu0 %881
        %v883 = vsel %vm858, %v839, -inf
        %884 = vmax.xlane.f32.xlu0 %v883
        %v885 = vpop.xlane.xlu0 %884
        %v886 = vsel %vm858, %v841, -inf
        %887 = vmax.xlane.f32.xlu0 %v886
        %v888 = vpop.xlane.xlu0 %887
        %v889 = vsel %vm858, %v844, -inf
        %890 = vmax.xlane.f32.xlu0 %v889
        %v891 = vpop.xlane.xlu0 %890
        %v892 = vsel %vm858, %v846, -inf
        %893 = vmax.xlane.f32.xlu0 %v892
        %v894 = vpop.xlane.xlu0 %893
        %v895 = vsel %vm858, %v849, -inf
        %896 = vmax.xlane.f32.xlu0 %v895
        %v897 = vpop.xlane.xlu0 %896
        %v898 = vsel %vm858, %v851, -inf
        %899 = vmax.xlane.f32.xlu0 %v898
        %v900 = vpop.xlane.xlu0 %899
        %v901 = vsel %vm858, %v854, -inf
        %902 = vmax.xlane.f32.xlu0 %v901
        %v903 = vpop.xlane.xlu0 %902
        %v904 = vsel %vm858, %v856, -inf
        %905 = vmax.xlane.f32.xlu0 %v904
        %v906 = vpop.xlane.xlu0 %905
        %v907 = vsub.f32 %v819, %v861
        %v908 = vsub.f32 %v821, %v864
        %v909 = vsub.f32 %v824, %v867
        %v910 = vsub.f32 %v826, %v870
        %v911 = vsub.f32 %v829, %v873
        %v912 = vsub.f32 %v831, %v876
        %v913 = vsub.f32 %v834, %v879
        %v914 = vsub.f32 %v836, %v882
        %v915 = vsub.f32 %v839, %v885
        %v916 = vsub.f32 %v841, %v888
        %v917 = vsub.f32 %v844, %v891
        %v918 = vsub.f32 %v846, %v894
        %v919 = vsub.f32 %v849, %v897
        %v920 = vsub.f32 %v851, %v900
        %v921 = vsub.f32 %v854, %v903
        %v922 = vsub.f32 %v856, %v906
        %v923 = vmul.f32 %v907, 1.442695
        %v924 = vpow.pop %v923
        %v925 = vmul.f32 %v908, 1.442695
        %v926 = vpow.pop %v925
        %v927 = vmul.f32 %v909, 1.442695
        %v928 = vpow.pop %v927
        %v929 = vmul.f32 %v910, 1.442695
        %v930 = vpow.pop %v929
        %v931 = vmul.f32 %v911, 1.442695
        %v932 = vpow.pop %v931
        %v933 = vmul.f32 %v912, 1.442695
        %v934 = vpow.pop %v933
        %v935 = vmul.f32 %v913, 1.442695
        %v936 = vpow.pop %v935
        %v937 = vmul.f32 %v914, 1.442695
        %v938 = vpow.pop %v937
        %v939 = vmul.f32 %v915, 1.442695
        %v940 = vpow.pop %v939
        %v941 = vmul.f32 %v916, 1.442695
        %v942 = vpow.pop %v941
        %v943 = vmul.f32 %v917, 1.442695
        %v944 = vpow.pop %v943
        %v945 = vmul.f32 %v918, 1.442695
        %v946 = vpow.pop %v945
        %v947 = vmul.f32 %v919, 1.442695
        %v948 = vpow.pop %v947
        %v949 = vmul.f32 %v920, 1.442695
        %v950 = vpow.pop %v949
        %v951 = vmul.f32 %v921, 1.442695
        %v952 = vpow.pop %v951
        %v953 = vmul.f32 %v922, 1.442695
        %v954 = vpow.pop %v953
        %v955 = vsel %vm858, %v924, 0.0
        %956 = vadd.xlane.f32.xlu0 %v955
        %v957 = vpop.xlane.xlu0 %956
        %v958 = vsel %vm858, %v926, 0.0
        %959 = vadd.xlane.f32.xlu0 %v958
        %v960 = vpop.xlane.xlu0 %959
        %v961 = vsel %vm858, %v928, 0.0
        %962 = vadd.xlane.f32.xlu0 %v961
        %v963 = vpop.xlane.xlu0 %962
        %v964 = vsel %vm858, %v930, 0.0
        %965 = vadd.xlane.f32.xlu0 %v964
        %v966 = vpop.xlane.xlu0 %965
        %v967 = vsel %vm858, %v932, 0.0
        %968 = vadd.xlane.f32.xlu0 %v967
        %v969 = vpop.xlane.xlu0 %968
        %v970 = vsel %vm858, %v934, 0.0
        %971 = vadd.xlane.f32.xlu0 %v970
        %v972 = vpop.xlane.xlu0 %971
        %v973 = vsel %vm858, %v936, 0.0
        %974 = vadd.xlane.f32.xlu0 %v973
        %v975 = vpop.xlane.xlu0 %974
        %v976 = vsel %vm858, %v938, 0.0
        %977 = vadd.xlane.f32.xlu0 %v976
        %v978 = vpop.xlane.xlu0 %977
        %v979 = vsel %vm858, %v940, 0.0
        %980 = vadd.xlane.f32.xlu0 %v979
        %v981 = vpop.xlane.xlu0 %980
        %v982 = vsel %vm858, %v942, 0.0
        %983 = vadd.xlane.f32.xlu0 %v982
        %v984 = vpop.xlane.xlu0 %983
        %v985 = vsel %vm858, %v944, 0.0
        %986 = vadd.xlane.f32.xlu0 %v985
        %v987 = vpop.xlane.xlu0 %986
        %v988 = vsel %vm858, %v946, 0.0
        %989 = vadd.xlane.f32.xlu0 %v988
        %v990 = vpop.xlane.xlu0 %989
        %v991 = vsel %vm858, %v948, 0.0
        %992 = vadd.xlane.f32.xlu0 %v991
        %v993 = vpop.xlane.xlu0 %992
        %v994 = vsel %vm858, %v950, 0.0
        %995 = vadd.xlane.f32.xlu0 %v994
        %v996 = vpop.xlane.xlu0 %995
        %v997 = vsel %vm858, %v952, 0.0
        %998 = vadd.xlane.f32.xlu0 %v997
        %v999 = vpop.xlane.xlu0 %998
        %v1000 = vsel %vm858, %v954, 0.0
        %1001 = vadd.xlane.f32.xlu0 %v1000
        %v1002 = vpop.xlane.xlu0 %1001
        %v1003 = vrcp.pop %v957
        %v1004 = vrcp.pop %v960
        %v1005 = vrcp.pop %v963
        %v1006 = vrcp.pop %v966
        %v1007 = vrcp.pop %v969
        %v1008 = vrcp.pop %v972
        %v1009 = vrcp.pop %v975
        %v1010 = vrcp.pop %v978
        %v1011 = vrcp.pop %v981
        %v1012 = vrcp.pop %v984
        %v1013 = vrcp.pop %v987
        %v1014 = vrcp.pop %v990
        %v1015 = vrcp.pop %v993
        %v1016 = vrcp.pop %v996
        %v1017 = vrcp.pop %v999
        %v1018 = vrcp.pop %v1002
        %v1019 = vmul.f32 %v924, %v1003
        %v1020 = vmul.f32 %v926, %v1004
        %v1021 = vmul.f32 %v928, %v1005
        %v1022 = vmul.f32 %v930, %v1006
        %v1023 = vmul.f32 %v932, %v1007
        %v1024 = vmul.f32 %v934, %v1008
        %v1025 = vmul.f32 %v936, %v1009
        %v1026 = vmul.f32 %v938, %v1010
        %v1027 = vmul.f32 %v940, %v1011
        %v1028 = vmul.f32 %v942, %v1012
        %v1029 = vmul.f32 %v944, %v1013
        %v1030 = vmul.f32 %v946, %v1014
        %v1031 = vmul.f32 %v948, %v1015
        %v1032 = vmul.f32 %v950, %v1016
        %v1033 = vmul.f32 %v952, %v1017
        %v1034 = vmul.f32 %v954, %v1018
        %1035 = vst.msk [vmem:[%s302] sm:$0xff] %vm858, %v1019
        %1036 = vst.msk [vmem:[%s302 + $0x8] sm:$0xff] %vm858, %v1020
        %1037 = vst.msk [vmem:[%s302 + $0x10] sm:$0xff] %vm858, %v1021
        %1038 = vst.msk [vmem:[%s302 + $0x18] sm:$0xff] %vm858, %v1022
        %1039 = vst.msk [vmem:[%s302 + $0x20] sm:$0xff] %vm858, %v1023
        %1040 = vst.msk [vmem:[%s302 + $0x28] sm:$0xff] %vm858, %v1024
        %1041 = vst.msk [vmem:[%s302 + $0x30] sm:$0xff] %vm858, %v1025
        %1042 = vst.msk [vmem:[%s302 + $0x38] sm:$0xff] %vm858, %v1026
        %1043 = vst.msk [vmem:[%s302 + $0x40] sm:$0xff] %vm858, %v1027
        %1044 = vst.msk [vmem:[%s302 + $0x48] sm:$0xff] %vm858, %v1028
        %1045 = vst.msk [vmem:[%s302 + $0x50] sm:$0xff] %vm858, %v1029
        %1046 = vst.msk [vmem:[%s302 + $0x58] sm:$0xff] %vm858, %v1030
        %1047 = vst.msk [vmem:[%s302 + $0x60] sm:$0xff] %vm858, %v1031
        %1048 = vst.msk [vmem:[%s302 + $0x68] sm:$0xff] %vm858, %v1032
        %1049 = vst.msk [vmem:[%s302 + $0x70] sm:$0xff] %vm858, %v1033
        %1050 = vst.msk [vmem:[%s302 + $0x78] sm:$0xff] %vm858, %v1034
        %s1051 = smul.u32 16, %s21
        %p1052 = scmp.lt.s32.totalorder %s1051, 31
        %s1053 = scalar_select %p1052, %s1051, 31
        %s1054 = smul.addr %s1053, 8
        %s1055 = scalar_lea.vmem %s7, %s1054
        // Predicated region
        $region53: #{tpu_custom_call.1} parent=47 // pred_check
          %p1056 = pneg %p191
        $region54: #{tpu_custom_call.1} parent=47 // pred_check_branch
          %1058 = sbr.rel (%p1056) target = $region56
        $region55: #{tpu_custom_call.1} parent=47 // pred_region
          %s1059 = smul.u32 16, %s21
        $region56: #{tpu_custom_call.1} parent=47 // pred_fallthru
          _
      $region48: #{tpu_custom_call.1} parent=5 // pred_fallthru
        _
      %p1060 = scmp.le.s32.totalorder 2, %s16
      // Predicated region
      $region57: #{tpu_custom_call.1} parent=5 // pred_check
        %p1061 = pneg %p1060
      $region58: #{tpu_custom_call.1} parent=5 // pred_check_branch
        %1063 = sbr.rel (%p1061) target = $region60
      $region59: #{tpu_custom_call.1} parent=5 // pred_region
        %s1064 = ssub.s32 %s16, 2
        // Predicated region
        $region61: #{tpu_custom_call.1} parent=59 // pred_check
          %p1065 = pneg %p197
        $region62: #{tpu_custom_call.1} parent=59 // pred_check_branch
          %1067 = sbr.rel (%p1065) target = $region64
        $region63: #{tpu_custom_call.1} parent=59 // pred_region
          %s1068 = smul.u32 16, %s22
          %p1069 = scmp.lt.s32.totalorder %s1068, 31
          %s1070 = scalar_select %p1069, %s1068, 31
          %s1071 = smul.addr %s1070, 8
          %s1072 = scalar_lea.vmem %s7, %s1071
        $region64: #{tpu_custom_call.1} parent=59 // pred_fallthru
          _
      $region60: #{tpu_custom_call.1} parent=5 // pred_fallthru
        _
    $region6: #{tpu_custom_call.1} parent=1 // loop_footer
      %s20 = sadd.s32 1, %s16
    $region7: #{tpu_custom_call.1} parent=1 // loop_footer_branch
      %15 = sbr.rel target = $region3
    $region8: #{tpu_custom_call.1} parent=1 // loop_exit
      _
    %1073 = vsyncpa [#allocation3], 1
    %s1074 = scalar_lea.sflag [#allocation3], 1
    %1075 = vsyncpa %s1074, 1

</llo_original>
